<compile_context>
chip_gen: v7x
topology: tpu7x:2x2x1
jax: 0.10.0
libtpu: 0.0.40
codegen_flags: <defaults>
</compile_context>

<pallas_src>
import jax
import jax.numpy as jnp
from jax.experimental import pallas as pl
from jax.experimental.pallas import tpu as pltpu


def fused_conv_relu_pool_kernel(p_ref, w_ref, o_ref, s_ref):
    """One sub-batch of NB images per grid step.

    p_ref : (1, NB*Mrows, K+1) bf16  parity-grouped im2col patches,
            Mrows = 4*Hq*(Wq+1); trailing column is 1.0 on real patch rows and
            0.0 on the left pool-pad rows (bias rides inside the matmul).
    w_ref : (K+1, 128)            bf16  conv weight; last row = bias; Cout->128.
    o_ref : (NB, Hq, Wq, 128)     f32   pooled output (channels-last, lane-dense).
    s_ref : (4, NB, Hq+1, Wq+1, 128) f32 scratch: conv parity planes
            (g = 2*row_parity + col_parity), each with a zero border row/col.
    """
    _, nb, hq1, wq1, cpad = s_ref.shape
    hq, wq = hq1 - 1, wq1 - 1
    rows_per_plane = hq * wq1                      # multiple of 8

    # ---- conv + bias + ReLU: ONE MXU matmul for the whole sub-batch ---------
    # M = NB*Mrows, f32 accumulate; ReLU stays f32 on the VPU (v5e-safe).
    val = jnp.maximum(
        jnp.dot(p_ref[0], w_ref[...], preferred_element_type=jnp.float32), 0.0)

    # ---- scatter parity planes into the border-padded scratch ---------------
    # One full-plane store per (image, parity); every slice is (8,128)-aligned
    # (rows_per_plane and wq1 are multiples of 8).  Scratch column 0 (conv col
    # -1) already holds exact zeros from the all-zero left-pad patch rows.
    for n in range(nb):
        for g in range(4):
            plane = n * 4 + g
            # Top border row (conv row -1): only the odd-conv-row planes
            # (g >= 2) are read at scratch row 0 by the pool below, so skip
            # the zero store for planes 0/1 (fewer vst on v5e's single slot).
            if g >= 2:
                s_ref[g, n, 0, :, :] = jnp.zeros((wq1, cpad), jnp.float32)
            r0 = plane * rows_per_plane
            s_ref[g, n, 1:hq1, :, :] = (
                val[r0:r0 + rows_per_plane, :].reshape(hq, wq1, cpad))

    # ---- 3x3 / stride-2 max pool ---------------------------------------------
    # s_ref[g, n, 1+a, 1+b, :] = relu(conv)[2a+gr, 2b+gc, :].  Output (i, j)
    # pools conv rows {2i-1,2i,2i+1} x cols {2j-1,2j,2j+1}.  Group the 9 terms
    # by column offset so all maxes run on full-width tile-aligned views and
    # only ONE sublane-shifted slice (a_full[..., 1:, :]) is needed:
    #   a_full col c -> conv cols at offset +1 usage, b_full col c -> offset 0.
    p1h = s_ref[1, :, 1:hq1, :, :]                 # (even row, odd col), rows i
    p3h = s_ref[3, :, 1:hq1, :, :]                 # (odd  row, odd col), rows i
    p3l = s_ref[3, :, 0:hq, :, :]                  # (odd  row, odd col), rows i-1
    a_full = jnp.maximum(s_ref[0, :, 1:hq1, :, :], p1h)
    a_full = jnp.maximum(a_full, jnp.maximum(s_ref[2, :, 1:hq1, :, :], p3h))
    a_full = jnp.maximum(a_full, jnp.maximum(s_ref[2, :, 0:hq, :, :], p3l))
    b_full = jnp.maximum(jnp.maximum(p1h, p3h), p3l)
    o_ref[...] = jnp.maximum(a_full[:, :, 1:wq1, :], b_full[:, :, 0:wq, :])


def _pick_grid_steps(n_batch):
    """1 big grid step on single-TensorCore chips (v5e/v6e) to kill per-step
    overhead; 2 'parallel' steps on dual-core parts (v7x, v4/v5p megacore)."""
    try:
        kind = jax.devices()[0].device_kind.lower()
    except Exception:
        kind = ""
    single_core = any(t in kind for t in ("v5e", "v5 lite", "v5lite",
                                          "v6e", "v6 lite", "v6lite"))
    if (not single_core) and n_batch >= 2 and n_batch % 2 == 0:
        return 2
    return 1


def zfnet_layer1_forward(x_nchw, conv_w, conv_b, *, nchw_output=True):
    """x_nchw: (N,3,H,W) f32; conv_w: (96,3,7,7); conv_b: (96,) -> (N,96,Ho,Wo).

    Pass nchw_output=False to keep the kernel's lane-dense channels-last
    (N,Ho,Wo,96) layout and skip the HBM round-trip of the final transpose.
    """
    N, Cin, H, W = x_nchw.shape
    Cout, _, kh, kw = conv_w.shape
    stride, pad = 2, 1
    CPAD = 128                                          # lane-dense channel count

    Hc = (H + 2 * pad - kh) // stride + 1               # 14 for 32x32, 110 for 224x224
    Wc = (W + 2 * pad - kw) // stride + 1
    # Parity-plane pooling (and the no-bottom/right pool padding) needs an even
    # conv map; real ZFNet 224x224 (Hc=110) satisfies this.
    assert Hc % 2 == 0 and Wc % 2 == 0, "parity-plane pooling assumes an even conv map"
    Hq, Wq = Hc // 2, Wc // 2                           # pool output (k=3,s=2,p=1)
    K = kh * kw * Cin
    Kaug = K + 1                                        # +1 "ones" column carrying the bias

    steps = _pick_grid_steps(N)
    NB = N // steps
    Mrows = 4 * Hq * (Wq + 1)                           # per-image rows (left pool-pad slot incl.)

    # ---- im2col emitted DIRECTLY in parity-grouped order (single host pass) --
    # TODO(synk): for realistic input sizes this still materializes a ~12x patch
    # tensor in HBM; restructure as in-kernel im2col (DMA the raw padded NHWC
    # image, build patches in VMEM) to remove it entirely.
    x = jnp.transpose(x_nchw, (0, 2, 3, 1)).astype(jnp.bfloat16)       # NHWC, bf16 early
    xp = jnp.pad(x, ((0, 0), (pad, pad), (pad, pad), (0, 0)))
    groups = []
    for gr in (0, 1):
        for gc in (0, 1):
            taps = []
            for di in range(kh):
                r0 = di + 2 * gr
                for dj in range(kw):
                    c0 = dj + 2 * gc
                    taps.append(xp[:, r0:r0 + 4 * (Hq - 1) + 1:4,
                                      c0:c0 + 4 * (Wq - 1) + 1:4, :])
            groups.append(jnp.concatenate(taps, axis=-1))              # (N,Hq,Wq,K), (kh,kw,Cin) order
    pg = jnp.stack(groups, axis=1)                                     # (N,4,Hq,Wq,K)
    ones = jnp.ones(pg.shape[:-1] + (1,), jnp.bfloat16)
    pg = jnp.concatenate([pg, ones], axis=-1)                          # bias carrier column
    pg = jnp.pad(pg, ((0, 0), (0, 0), (0, 0), (1, 0), (0, 0)))         # left pool-pad slot (all-zero rows)
    patches_g = pg.reshape(steps, NB * Mrows, Kaug)                    # one slab per grid step

    # ---- weights: (Cout,Cin,kh,kw) -> (K+1, 128); last row is the bias -------
    w_mat = jnp.transpose(conv_w, (2, 3, 1, 0)).reshape(K, Cout)
    w_aug = jnp.concatenate([w_mat, conv_b.reshape(1, Cout)], axis=0)
    w_aug = jnp.pad(w_aug, ((0, 0), (0, CPAD - Cout))).astype(jnp.bfloat16)

    # ---- advisory cost: real conv work (not padded Mrows x CPAD) --------------
    cost = pl.CostEstimate(
        flops=2 * N * (4 * Hq * Wq) * K * Cout,
        transcendentals=0,
        bytes_accessed=int(patches_g.size * 2 + w_aug.size * 2
                           + N * Hq * Wq * CPAD * 4))

    # ---- explicit VMEM budget (keeps realistic sizes inside v7x's 64 MiB) ----
    block_bytes = (2 * NB * Mrows * Kaug * 2                 # patches, double-buffered bf16
                   + 2 * Kaug * CPAD * 2                     # weights (resident)
                   + NB * Mrows * CPAD * 4                   # f32 matmul result staging
                   + 4 * NB * (Hq + 1) * (Wq + 1) * CPAD * 4 # parity scratch
                   + 2 * NB * Hq * Wq * CPAD * 4)            # output, double-buffered
    vmem_limit = int(min(max(block_bytes + (2 << 20), 32 << 20), 48 << 20))
    # TODO(synk): at 224x224 inputs add an M-row-block grid axis instead of
    # growing the per-step block past this budget.

    pooled = pl.pallas_call(
        fused_conv_relu_pool_kernel,
        out_shape=jax.ShapeDtypeStruct((N, Hq, Wq, CPAD), jnp.float32),
        grid=(steps,),
        in_specs=[
            pl.BlockSpec((1, NB * Mrows, Kaug), lambda s: (s, 0, 0)),
            pl.BlockSpec((Kaug, CPAD), lambda s: (0, 0)),    # constant map -> stays resident
        ],
        out_specs=pl.BlockSpec((NB, Hq, Wq, CPAD), lambda s: (s, 0, 0, 0)),
        scratch_shapes=[pltpu.VMEM((4, NB, Hq + 1, Wq + 1, CPAD), jnp.float32)],
        compiler_params=pltpu.CompilerParams(
            dimension_semantics=("parallel",),
            vmem_limit_bytes=vmem_limit),
        cost_estimate=cost,
    )(patches_g, w_aug)

    pooled = pooled[..., :Cout]                  # drop zero-padded channels (NHWC)
    if not nchw_output:
        return pooled
    return jnp.transpose(pooled, (0, 3, 1, 2))   # PyTorch-semantics NCHW


def ref_forward(x_nchw, conv_w, conv_b):
    """Pure-JAX reference matching the PyTorch module semantics."""
    y = jax.lax.conv_general_dilated(
        x_nchw, conv_w, window_strides=(2, 2), padding=((1, 1), (1, 1)),
        dimension_numbers=("NCHW", "OIHW", "NCHW"))
    y = jnp.maximum(y + conv_b[None, :, None, None], 0.0)
    return jax.lax.reduce_window(
        y, -jnp.inf, jax.lax.max,
        window_dimensions=(1, 1, 3, 3), window_strides=(1, 1, 2, 2),
        padding=((0, 0), (0, 0), (1, 1), (1, 1)))


if __name__ == "__main__":
    key = jax.random.PRNGKey(0)
    k_x, k_w, k_b = jax.random.split(key, 3)

    # N=2, Cin=3 (fixed by the module), 32x32 spatial
    N, Cin, H, W = 2, 3, 32, 32
    x = jax.random.normal(k_x, (N, Cin, H, W), dtype=jnp.float32)

    # deterministic synthetic parameters for layer1's conv (96, 3, 7, 7)
    # TODO(synk): conv2..conv5 / fc1..fc3 / self.maxpool / self.relu exist in
    # __init__ but are unused by forward(), so they are not materialized here.
    conv_w = jax.random.normal(k_w, (96, 3, 7, 7), dtype=jnp.float32) * 0.05
    conv_b = jax.random.normal(k_b, (96,), dtype=jnp.float32) * 0.05

    fwd = jax.jit(zfnet_layer1_forward)
    out = fwd(x, conv_w, conv_b)
    jax.block_until_ready(out)

    # conv (32+2-7)//2+1 = 14 -> pool (14+2-3)//2+1 = 7 -> (2, 96, 7, 7)
    assert out.shape == (N, 96, 7, 7), out.shape
    assert out.dtype == jnp.float32

    # numerical check vs a pure-JAX reference (bf16 matmul operands -> loose tol)
    ref = ref_forward(x, conv_w, conv_b)
    assert bool(jnp.allclose(out, ref, rtol=5e-2, atol=5e-2)), "mismatch vs reference"

    print("KERNEL_OK")
</pallas_src>

<mosaic_0001>
module attributes {stable_mosaic.version = 11 : i64} {
  func.func @fused_conv_relu_pool_kernel(%arg0: i32, %arg1: memref<1x224x148xbf16, #tpu.memory_space<vmem>>, %arg2: memref<148x128xbf16, #tpu.memory_space<vmem>>, %arg3: memref<1x7x7x128xf32, #tpu.memory_space<vmem>>, %arg4: memref<4x1x8x8x128xf32, #tpu.memory_space<vmem>>) attributes {dimension_semantics = [#tpu.dimension_semantics<parallel>], iteration_bounds = array<i64: 2>, scalar_prefetch = 0 : i64, scratch_operands = 1 : i64, tpu.core_type = #tpu.core_type<tc>, window_params = [{transform_indices = @transform_0, window_bounds = array<i64: 1, 224, 148>}, {pipeline_mode = #tpu.pipeline_mode<synchronous>, transform_indices = @transform_1, window_bounds = array<i64: 148, 128>}, {transform_indices = @transform_2, window_bounds = array<i64: 1, 7, 7, 128>}]} {
    %c0 = arith.constant 0 : index
    %c0_0 = arith.constant 0 : index
    %c0_1 = arith.constant 0 : index
    %0 = vector.load %arg1[%c0, %c0_0, %c0_1] : memref<1x224x148xbf16, #tpu.memory_space<vmem>>, vector<1x224x148xbf16>
    %1 = vector.shape_cast %0 : vector<1x224x148xbf16> to vector<224x148xbf16>
    %c0_2 = arith.constant 0 : index
    %c0_3 = arith.constant 0 : index
    %2 = vector.load %arg2[%c0_2, %c0_3] : memref<148x128xbf16, #tpu.memory_space<vmem>>, vector<148x128xbf16>
    %cst = arith.constant dense<0.000000e+00> : vector<224x128xf32>
    %3 = tpu.matmul %1, %2, %cst {dimension_numbers = #tpu.dot_dimension_numbers<[1], [0], [0], [1], [0, 0, 1, 1], [], []>} : vector<224x148xbf16>, vector<148x128xbf16>, vector<224x128xf32> -> vector<224x128xf32>
    %cst_4 = arith.constant 0.000000e+00 : f32
    %4 = vector.broadcast %cst_4 : f32 to vector<224x128xf32>
    %5 = arith.maximumf %3, %4 : vector<224x128xf32>
    %6 = vector.extract_strided_slice %5 {offsets = [0, 0], sizes = [56, 128], strides = [1, 1]} : vector<224x128xf32> to vector<56x128xf32>
    %7 = vector.shape_cast %6 : vector<56x128xf32> to vector<7x8x128xf32>
    %c0_5 = arith.constant 0 : index
    %c0_6 = arith.constant 0 : index
    %c1 = arith.constant 1 : index
    %c0_7 = arith.constant 0 : index
    %c0_8 = arith.constant 0 : index
    %8 = vector.load %arg4[%c0_5, %c0_6, %c1, %c0_7, %c0_8] : memref<4x1x8x8x128xf32, #tpu.memory_space<vmem>>, vector<1x1x7x8x128xf32>
    %9 = vector.shape_cast %8 : vector<1x1x7x8x128xf32> to vector<7x8x128xf32>
    %10 = vector.shape_cast %7 : vector<7x8x128xf32> to vector<1x1x7x8x128xf32>
    tpu.vector_store %arg4[%c0_5, %c0_6, %c1, %c0_7, %c0_8], %10 {strides = array<i32>} : memref<4x1x8x8x128xf32, #tpu.memory_space<vmem>>, vector<1x1x7x8x128xf32>,
    %11 = vector.extract_strided_slice %5 {offsets = [56, 0], sizes = [56, 128], strides = [1, 1]} : vector<224x128xf32> to vector<56x128xf32>
    %12 = vector.shape_cast %11 : vector<56x128xf32> to vector<7x8x128xf32>
    %c1_9 = arith.constant 1 : index
    %c0_10 = arith.constant 0 : index
    %c1_11 = arith.constant 1 : index
    %c0_12 = arith.constant 0 : index
    %c0_13 = arith.constant 0 : index
    %13 = vector.load %arg4[%c1_9, %c0_10, %c1_11, %c0_12, %c0_13] : memref<4x1x8x8x128xf32, #tpu.memory_space<vmem>>, vector<1x1x7x8x128xf32>
    %14 = vector.shape_cast %13 : vector<1x1x7x8x128xf32> to vector<7x8x128xf32>
    %15 = vector.shape_cast %12 : vector<7x8x128xf32> to vector<1x1x7x8x128xf32>
    tpu.vector_store %arg4[%c1_9, %c0_10, %c1_11, %c0_12, %c0_13], %15 {strides = array<i32>} : memref<4x1x8x8x128xf32, #tpu.memory_space<vmem>>, vector<1x1x7x8x128xf32>,
    %cst_14 = arith.constant 0.000000e+00 : f32
    %16 = vector.broadcast %cst_14 : f32 to vector<8x128xf32>
    %c2 = arith.constant 2 : index
    %c0_15 = arith.constant 0 : index
    %c0_16 = arith.constant 0 : index
    %c0_17 = arith.constant 0 : index
    %c0_18 = arith.constant 0 : index
    %17 = vector.load %arg4[%c2, %c0_15, %c0_16, %c0_17, %c0_18] : memref<4x1x8x8x128xf32, #tpu.memory_space<vmem>>, vector<1x1x1x8x128xf32>
    %18 = vector.shape_cast %17 : vector<1x1x1x8x128xf32> to vector<8x128xf32>
    %19 = vector.shape_cast %16 : vector<8x128xf32> to vector<1x1x1x8x128xf32>
    tpu.vector_store %arg4[%c2, %c0_15, %c0_16, %c0_17, %c0_18], %19 {strides = array<i32>} : memref<4x1x8x8x128xf32, #tpu.memory_space<vmem>>, vector<1x1x1x8x128xf32>,
    %20 = vector.extract_strided_slice %5 {offsets = [112, 0], sizes = [56, 128], strides = [1, 1]} : vector<224x128xf32> to vector<56x128xf32>
    %21 = vector.shape_cast %20 : vector<56x128xf32> to vector<7x8x128xf32>
    %c2_19 = arith.constant 2 : index
    %c0_20 = arith.constant 0 : index
    %c1_21 = arith.constant 1 : index
    %c0_22 = arith.constant 0 : index
    %c0_23 = arith.constant 0 : index
    %22 = vector.load %arg4[%c2_19, %c0_20, %c1_21, %c0_22, %c0_23] : memref<4x1x8x8x128xf32, #tpu.memory_space<vmem>>, vector<1x1x7x8x128xf32>
    %23 = vector.shape_cast %22 : vector<1x1x7x8x128xf32> to vector<7x8x128xf32>
    %24 = vector.shape_cast %21 : vector<7x8x128xf32> to vector<1x1x7x8x128xf32>
    tpu.vector_store %arg4[%c2_19, %c0_20, %c1_21, %c0_22, %c0_23], %24 {strides = array<i32>} : memref<4x1x8x8x128xf32, #tpu.memory_space<vmem>>, vector<1x1x7x8x128xf32>,
    %cst_24 = arith.constant 0.000000e+00 : f32
    %25 = vector.broadcast %cst_24 : f32 to vector<8x128xf32>
    %c3 = arith.constant 3 : index
    %c0_25 = arith.constant 0 : index
    %c0_26 = arith.constant 0 : index
    %c0_27 = arith.constant 0 : index
    %c0_28 = arith.constant 0 : index
    %26 = vector.load %arg4[%c3, %c0_25, %c0_26, %c0_27, %c0_28] : memref<4x1x8x8x128xf32, #tpu.memory_space<vmem>>, vector<1x1x1x8x128xf32>
    %27 = vector.shape_cast %26 : vector<1x1x1x8x128xf32> to vector<8x128xf32>
    %28 = vector.shape_cast %25 : vector<8x128xf32> to vector<1x1x1x8x128xf32>
    tpu.vector_store %arg4[%c3, %c0_25, %c0_26, %c0_27, %c0_28], %28 {strides = array<i32>} : memref<4x1x8x8x128xf32, #tpu.memory_space<vmem>>, vector<1x1x1x8x128xf32>,
    %29 = vector.extract_strided_slice %5 {offsets = [168, 0], sizes = [56, 128], strides = [1, 1]} : vector<224x128xf32> to vector<56x128xf32>
    %30 = vector.shape_cast %29 : vector<56x128xf32> to vector<7x8x128xf32>
    %c3_29 = arith.constant 3 : index
    %c0_30 = arith.constant 0 : index
    %c1_31 = arith.constant 1 : index
    %c0_32 = arith.constant 0 : index
    %c0_33 = arith.constant 0 : index
    %31 = vector.load %arg4[%c3_29, %c0_30, %c1_31, %c0_32, %c0_33] : memref<4x1x8x8x128xf32, #tpu.memory_space<vmem>>, vector<1x1x7x8x128xf32>
    %32 = vector.shape_cast %31 : vector<1x1x7x8x128xf32> to vector<7x8x128xf32>
    %33 = vector.shape_cast %30 : vector<7x8x128xf32> to vector<1x1x7x8x128xf32>
    tpu.vector_store %arg4[%c3_29, %c0_30, %c1_31, %c0_32, %c0_33], %33 {strides = array<i32>} : memref<4x1x8x8x128xf32, #tpu.memory_space<vmem>>, vector<1x1x7x8x128xf32>,
    %c1_34 = arith.constant 1 : index
    %c0_35 = arith.constant 0 : index
    %c1_36 = arith.constant 1 : index
    %c0_37 = arith.constant 0 : index
    %c0_38 = arith.constant 0 : index
    %34 = vector.load %arg4[%c1_34, %c0_35, %c1_36, %c0_37, %c0_38] : memref<4x1x8x8x128xf32, #tpu.memory_space<vmem>>, vector<1x1x7x8x128xf32>
    %35 = vector.shape_cast %34 : vector<1x1x7x8x128xf32> to vector<1x7x8x128xf32>
    %c3_39 = arith.constant 3 : index
    %c0_40 = arith.constant 0 : index
    %c1_41 = arith.constant 1 : index
    %c0_42 = arith.constant 0 : index
    %c0_43 = arith.constant 0 : index
    %36 = vector.load %arg4[%c3_39, %c0_40, %c1_41, %c0_42, %c0_43] : memref<4x1x8x8x128xf32, #tpu.memory_space<vmem>>, vector<1x1x7x8x128xf32>
    %37 = vector.shape_cast %36 : vector<1x1x7x8x128xf32> to vector<1x7x8x128xf32>
    %c3_44 = arith.constant 3 : index
    %c0_45 = arith.constant 0 : index
    %c0_46 = arith.constant 0 : index
    %c0_47 = arith.constant 0 : index
    %c0_48 = arith.constant 0 : index
    %38 = vector.load %arg4[%c3_44, %c0_45, %c0_46, %c0_47, %c0_48] : memref<4x1x8x8x128xf32, #tpu.memory_space<vmem>>, vector<1x1x7x8x128xf32>
    %39 = vector.shape_cast %38 : vector<1x1x7x8x128xf32> to vector<1x7x8x128xf32>
    %c0_49 = arith.constant 0 : index
    %c0_50 = arith.constant 0 : index
    %c1_51 = arith.constant 1 : index
    %c0_52 = arith.constant 0 : index
    %c0_53 = arith.constant 0 : index
    %40 = vector.load %arg4[%c0_49, %c0_50, %c1_51, %c0_52, %c0_53] : memref<4x1x8x8x128xf32, #tpu.memory_space<vmem>>, vector<1x1x7x8x128xf32>
    %41 = vector.shape_cast %40 : vector<1x1x7x8x128xf32> to vector<1x7x8x128xf32>
    %42 = arith.maximumf %41, %35 : vector<1x7x8x128xf32>
    %c2_54 = arith.constant 2 : index
    %c0_55 = arith.constant 0 : index
    %c1_56 = arith.constant 1 : index
    %c0_57 = arith.constant 0 : index
    %c0_58 = arith.constant 0 : index
    %43 = vector.load %arg4[%c2_54, %c0_55, %c1_56, %c0_57, %c0_58] : memref<4x1x8x8x128xf32, #tpu.memory_space<vmem>>, vector<1x1x7x8x128xf32>
    %44 = vector.shape_cast %43 : vector<1x1x7x8x128xf32> to vector<1x7x8x128xf32>
    %45 = arith.maximumf %44, %37 : vector<1x7x8x128xf32>
    %46 = arith.maximumf %42, %45 : vector<1x7x8x128xf32>
    %c2_59 = arith.constant 2 : index
    %c0_60 = arith.constant 0 : index
    %c0_61 = arith.constant 0 : index
    %c0_62 = arith.constant 0 : index
    %c0_63 = arith.constant 0 : index
    %47 = vector.load %arg4[%c2_59, %c0_60, %c0_61, %c0_62, %c0_63] : memref<4x1x8x8x128xf32, #tpu.memory_space<vmem>>, vector<1x1x7x8x128xf32>
    %48 = vector.shape_cast %47 : vector<1x1x7x8x128xf32> to vector<1x7x8x128xf32>
    %49 = arith.maximumf %48, %39 : vector<1x7x8x128xf32>
    %50 = arith.maximumf %46, %49 : vector<1x7x8x128xf32>
    %51 = arith.maximumf %35, %37 : vector<1x7x8x128xf32>
    %52 = arith.maximumf %51, %39 : vector<1x7x8x128xf32>
    %53 = vector.extract_strided_slice %50 {offsets = [0, 0, 1, 0], sizes = [1, 7, 7, 128], strides = [1, 1, 1, 1]} : vector<1x7x8x128xf32> to vector<1x7x7x128xf32>
    %54 = vector.extract_strided_slice %52 {offsets = [0, 0, 0, 0], sizes = [1, 7, 7, 128], strides = [1, 1, 1, 1]} : vector<1x7x8x128xf32> to vector<1x7x7x128xf32>
    %55 = arith.maximumf %53, %54 : vector<1x7x7x128xf32>
    %c0_64 = arith.constant 0 : index
    %c0_65 = arith.constant 0 : index
    %c0_66 = arith.constant 0 : index
    %c0_67 = arith.constant 0 : index
    %56 = vector.load %arg3[%c0_64, %c0_65, %c0_66, %c0_67] : memref<1x7x7x128xf32, #tpu.memory_space<vmem>>, vector<1x7x7x128xf32>
    tpu.vector_store %arg3[%c0_64, %c0_65, %c0_66, %c0_67], %55 {strides = array<i32>} : memref<1x7x7x128xf32, #tpu.memory_space<vmem>>, vector<1x7x7x128xf32>,
    return
  }
  func.func @transform_0(%arg0: i32) -> (i32, i32, i32) {
    %c0_i32 = arith.constant 0 : i32
    %c0_i32_0 = arith.constant 0 : i32
    %c0_i32_1 = arith.constant 0 : i32
    return %arg0, %c0_i32, %c0_i32_0 : i32, i32, i32
  }
  func.func @transform_1(%arg0: i32) -> (i32, i32) {
    %c0_i32 = arith.constant 0 : i32
    %c0_i32_0 = arith.constant 0 : i32
    %c0_i32_1 = arith.constant 0 : i32
    return %c0_i32, %c0_i32_0 : i32, i32
  }
  func.func @transform_2(%arg0: i32) -> (i32, i32, i32, i32) {
    %c0_i32 = arith.constant 0 : i32
    %c0_i32_0 = arith.constant 0 : i32
    %c0_i32_1 = arith.constant 0 : i32
    %c0_i32_2 = arith.constant 0 : i32
    return %arg0, %c0_i32, %c0_i32_0, %c0_i32_1 : i32, i32, i32, i32
  }
}

</mosaic_0001>

<llo_original>
// kernel: zfnet_layer1_forward.1
$region0: #{zfnet_layer1_forward.1}
  #allocation0 [shape = 'u32[]', space=smem, size = 0x4, offset = 0x4, fixed_abs, tag = 'smem constant byte address 0x4 - core index']
  #allocation1 [shape = 'u32[144,128]{1,0:T(1,128)}', space=vmem, size = 0x12000, scoped, tag = 'internal scratch']
  #allocation2 [shape = 'f32[4,1,8,8,128]{4,3,2,1,0:T(8,128)}', space=vmem, size = 0x20000, scoped, tag = 'scratch operand']
  %s0 = inlined_call_operand.vmem [shape: bf16[2,224,148], index: 0, kind: input, shape index: {}]
  %s1 = inlined_call_operand.vmem [shape: bf16[148,128], index: 1, kind: input, shape index: {}]
  %s2 = inlined_call_operand.vmem [shape: f32[2,7,7,128], index: 2, kind: output, shape index: {}]
  %s3 = sld [smem:[#allocation0]]
  $region41: #{zfnet_layer1_forward.1} parent=0
    _
  %s5 = ssub.s32 1, %s3
  %s6 = scalar_select 0, %s5, %s3
  loop: start=0, step=1, limit=4
  $region2: #{zfnet_layer1_forward.1} parent=0 // loop_pre_header
    _
  $region3: #{zfnet_layer1_forward.1} parent=0 // loop_header
    %s8 = sphi 0, %s12
    %p9 = scmp.ge.s32.totalorder %s8, 4
    %s18 = sphi 0, %s20
    %s21 = sphi 0, %s18
    %s22 = sphi 0, %s21
    %s38 = sphi 0, %s22
    %s42 = sphi 0, %s42
    %s44 = sphi 0, %s42
    %s45 = sphi 0, %s44
    %s59 = sphi 0, %s45
    %s65 = sphi 0, %s67
    %s68 = sphi 0, %s65
    %s69 = sphi 0, %s68
    %s85 = sphi 0, %s69
  $region4: #{zfnet_layer1_forward.1} parent=0 // loop_header_branch
    %11 = sbr.rel (%p9) target = $region8
  $region5: #{zfnet_layer1_forward.1} parent=0 // loop_body
    %s13 = ssub.s32 %s8, 1
    %s14 = ssub.s32 %s8, 2
    %s15 = sadd.s32 %s8, 1
    %s16 = ssub.s32 %s8, %s15
    %p17 = scmp.eq.s32.totalorder %s16, 0
    %s19 = sadd.s32 %s18, 1
    %s20 = scalar_select %p17, %s18, %s19
    %p23 = pneg %p17
    %p24 = scmp.eq.s32.totalorder %s8, 1
    %p25 = por %p23, %p24
    %p26 = scmp.ne.s32.totalorder %s18, %s21
    %p27 = scmp.eq.s32.totalorder %s8, 0
    %p28 = por %p26, %p27
    %p29 = scmp.ne.s32.totalorder %s18, %s21
    %p30 = scmp.eq.s32.totalorder %s13, 1
    %p31 = por %p29, %p30
    %p32 = scmp.ne.s32.totalorder %s21, %s22
    %p33 = scmp.eq.s32.totalorder %s13, 0
    %p34 = por %p32, %p33
    %p35 = scmp.ne.s32.totalorder %s21, %s22
    %p36 = scmp.eq.s32.totalorder %s14, 1
    %p37 = por %p35, %p36
    %p39 = scmp.ne.s32.totalorder %s22, %s38
    %p40 = scmp.eq.s32.totalorder %s14, 0
    %p41 = por %p39, %p40
    %s43 = sadd.s32 %s42, 1
    %p46 = scmp.eq.s32.totalorder %s8, 1
    %p47 = scmp.ne.s32.totalorder %s42, %s44
    %p48 = scmp.eq.s32.totalorder %s8, 0
    %p49 = por %p47, %p48
    %p50 = scmp.ne.s32.totalorder %s42, %s44
    %p51 = scmp.eq.s32.totalorder %s13, 1
    %p52 = por %p50, %p51
    %p53 = scmp.ne.s32.totalorder %s44, %s45
    %p54 = scmp.eq.s32.totalorder %s13, 0
    %p55 = por %p53, %p54
    %p56 = scmp.ne.s32.totalorder %s44, %s45
    %p57 = scmp.eq.s32.totalorder %s14, 1
    %p58 = por %p56, %p57
    %p60 = scmp.ne.s32.totalorder %s45, %s59
    %p61 = scmp.eq.s32.totalorder %s14, 0
    %p62 = por %p60, %p61
    %s63 = ssub.s32 %s8, %s15
    %p64 = scmp.eq.s32.totalorder %s63, 0
    %s66 = sadd.s32 %s65, 1
    %s67 = scalar_select %p64, %s65, %s66
    %p70 = pneg %p64
    %p71 = scmp.eq.s32.totalorder %s8, 1
    %p72 = por %p70, %p71
    %p73 = scmp.ne.s32.totalorder %s65, %s68
    %p74 = scmp.eq.s32.totalorder %s8, 0
    %p75 = por %p73, %p74
    %p76 = scmp.ne.s32.totalorder %s65, %s68
    %p77 = scmp.eq.s32.totalorder %s13, 1
    %p78 = por %p76, %p77
    %p79 = scmp.ne.s32.totalorder %s68, %s69
    %p80 = scmp.eq.s32.totalorder %s13, 0
    %p81 = por %p79, %p80
    %p82 = scmp.ne.s32.totalorder %s68, %s69
    %p83 = scmp.eq.s32.totalorder %s14, 1
    %p84 = por %p82, %p83
    %p86 = scmp.ne.s32.totalorder %s69, %s85
    %p87 = scmp.eq.s32.totalorder %s14, 0
    %p88 = por %p86, %p87
    %p89 = scmp.le.s32.totalorder 1, %s8
    %p90 = scmp.lt.s32.totalorder %s8, 3
    %p91 = pnand %p89, %p90
    %p92 = pneg %p91
    // Predicated region
    $region9: #{zfnet_layer1_forward.1} parent=5 // pred_check
      _
    $region10: #{zfnet_layer1_forward.1} parent=5 // pred_check_branch
      %94 = sbr.rel (%p91) target = $region12
    $region11: #{zfnet_layer1_forward.1} parent=5 // pred_region
      %s95 = ssub.s32 %s8, 1
      // Predicated region
      $region13: #{zfnet_layer1_forward.1} parent=11 // pred_check
        %p96 = pneg %p55
      $region14: #{zfnet_layer1_forward.1} parent=11 // pred_check_branch
        %98 = sbr.rel (%p96) target = $region16
      $region15: #{zfnet_layer1_forward.1} parent=11 // pred_region
        _
      $region16: #{zfnet_layer1_forward.1} parent=11 // pred_fallthru
        _
    $region12: #{zfnet_layer1_forward.1} parent=5 // pred_fallthru
      _
    %p99 = scmp.lt.s32.totalorder %s8, 2
    // Predicated region
    $region17: #{zfnet_layer1_forward.1} parent=5 // pred_check
      %p100 = pneg %p99
    $region18: #{zfnet_layer1_forward.1} parent=5 // pred_check_branch
      %102 = sbr.rel (%p100) target = $region20
    $region19: #{zfnet_layer1_forward.1} parent=5 // pred_region
      // Predicated region
      $region21: #{zfnet_layer1_forward.1} parent=19 // pred_check
        %p103 = pneg %p28
      $region22: #{zfnet_layer1_forward.1} parent=19 // pred_check_branch
        %105 = sbr.rel (%p103) target = $region24
      $region23: #{zfnet_layer1_forward.1} parent=19 // pred_region
        %p106 = scmp.lt.s32.totalorder %s8, 1
        %s107 = scalar_select %p106, %s8, 1
        %s108 = smul.addr %s107, 56
        %s109 = smul.addr %s108, 4
        %s110 = scalar_lea.vmem %s0, %s109
      $region24: #{zfnet_layer1_forward.1} parent=19 // pred_fallthru
        _
    $region20: #{zfnet_layer1_forward.1} parent=5 // pred_fallthru
      _
    %p111 = scmp.le.s32.totalorder 1, %s8
    %p112 = scmp.lt.s32.totalorder %s8, 3
    %p113 = pnand %p111, %p112
    %p114 = pneg %p113
    // Predicated region
    $region25: #{zfnet_layer1_forward.1} parent=5 // pred_check
      _
    $region26: #{zfnet_layer1_forward.1} parent=5 // pred_check_branch
      %116 = sbr.rel (%p113) target = $region28
    $region27: #{zfnet_layer1_forward.1} parent=5 // pred_region
      %s117 = ssub.s32 %s8, 1
      %p118 = scmp.lt.s32.totalorder %s13, 1
      %s119 = scalar_select %p118, %s13, 1
      %s120 = smul.addr %s119, 56
      %s121 = smul.addr %s120, 4
      %s122 = scalar_lea.vmem %s0, %s121
      %p123 = pneg %p34
      %p124 = pneg %p31
      %p125 = pneg %p55
      %p126 = pneg %p52
      %p127 = pneg %p81
      %p128 = pneg %p78
      %p129 = scmp.lt.s32.totalorder %s13, 1
      %s130 = scalar_select %p129, %s13, 1
      %s131 = smul.addr %s130, 7
      %s132 = smul.addr %s131, 8
      %s133 = scalar_lea.vmem %s2, %s132
      %p134 = scmp.lt.s32.totalorder %s13, 1
      %s135 = scalar_select %p134, %s13, 1
      %s136 = smul.addr %s135, 56
      %s137 = smul.addr %s136, 4
      %s138 = scalar_lea.vmem %s0, %s137
      %p139 = scmp.lt.s32.totalorder %s13, 1
      %s140 = scalar_select %p139, %s13, 1
      %s141 = smul.addr %s140, 7
      %s142 = smul.addr %s141, 8
      %s143 = scalar_lea.vmem %s2, %s142
      %v145 = vld [vmem:[%s138] sm:$0xff]
      %v146 = vld [vmem:[%s138 + $0x8] sm:$0xff]
      %v147 = vld [vmem:[%s138 + $0x10] sm:$0xff]
      %v148 = vld [vmem:[%s138 + $0x18] sm:$0xff]
      %v149 = vld [vmem:[%s138 + $0x20] sm:$0xff]
      %v150 = vld [vmem:[%s138 + $0x28] sm:$0xff]
      %v151 = vld [vmem:[%s138 + $0x30] sm:$0xff]
      %v152 = vld [vmem:[%s138 + $0x38] sm:$0xff]
      %v153 = vld [vmem:[%s138 + $0x40] sm:$0xff]
      %v154 = vld [vmem:[%s138 + $0x48] sm:$0xff]
      %v155 = vld [vmem:[%s138 + $0x50] sm:$0xff]
      %v156 = vld [vmem:[%s138 + $0x58] sm:$0xff]
      %v157 = vld [vmem:[%s138 + $0x60] sm:$0xff]
      %v158 = vld [vmem:[%s138 + $0x68] sm:$0xff]
      %v159 = vld [vmem:[%s138 + $0x70] sm:$0xff]
      %v160 = vld [vmem:[%s138 + $0x78] sm:$0xff]
      %v161 = vld [vmem:[%s138 + $0x80] sm:$0xff]
      %v162 = vld [vmem:[%s138 + $0x88] sm:$0xff]
      %v163 = vld [vmem:[%s138 + $0x90] sm:$0xff]
      %v164 = vld [vmem:[%s138 + $0x98] sm:$0xff]
      %v165 = vld [vmem:[%s138 + $0xa0] sm:$0xff]
      %v166 = vld [vmem:[%s138 + $0xa8] sm:$0xff]
      %v167 = vld [vmem:[%s138 + $0xb0] sm:$0xff]
      %v168 = vld [vmem:[%s138 + $0xb8] sm:$0xff]
      %v169 = vld [vmem:[%s138 + $0xc0] sm:$0xff]
      %v170 = vld [vmem:[%s138 + $0xc8] sm:$0xff]
      %v171 = vld [vmem:[%s138 + $0xd0] sm:$0xff]
      %v172 = vld [vmem:[%s138 + $0xd8] sm:$0xff]
      %v173 = vld [vmem:[%s1] sm:$0xf]
      %v174 = vld [vmem:[%s1 + $0x4] sm:$0xf]
      %v175 = vld [vmem:[%s1 + $0x8] sm:$0xf]
      %v176 = vld [vmem:[%s1 + $0xc] sm:$0xf]
      %v177 = vld [vmem:[%s1 + $0x10] sm:$0xf]
      %v178 = vld [vmem:[%s1 + $0x14] sm:$0xf]
      %v179 = vld [vmem:[%s1 + $0x18] sm:$0xf]
      %v180 = vld [vmem:[%s1 + $0x1c] sm:$0xf]
      %v181 = vld [vmem:[%s1 + $0x20] sm:$0xf]
      %v182 = vld [vmem:[%s1 + $0x24] sm:$0xf]
      %v183 = vld [vmem:[%s1 + $0x28] sm:$0xf]
      %v184 = vld [vmem:[%s1 + $0x2c] sm:$0xf]
      %v185 = vld [vmem:[%s1 + $0x30] sm:$0xf]
      %v186 = vld [vmem:[%s1 + $0x34] sm:$0xf]
      %v187 = vld [vmem:[%s1 + $0x38] sm:$0xf]
      %v188 = vld [vmem:[%s1 + $0x3c] sm:$0xf]
      %v189 = vld [vmem:[%s1 + $0x40] sm:$0xf]
      %v190 = vld [vmem:[%s1 + $0x44] sm:$0xf]
      %v191 = vld [vmem:[%s1 + $0x48] sm:$0x3]
      %v220 = vunpack.c.l.b16 %v145
      %v221 = vunpack.c.h.b16 %v145
      %v222 = vunpack.c.l.b16 %v146
      %v223 = vunpack.c.h.b16 %v146
      %v224 = vunpack.c.l.b16 %v147
      %v225 = vunpack.c.h.b16 %v147
      %v226 = vunpack.c.l.b16 %v148
      %v227 = vunpack.c.h.b16 %v148
      %v228 = vunpack.c.l.b16 %v149
      %v229 = vunpack.c.h.b16 %v149
      %v230 = vunpack.c.l.b16 %v150
      %v231 = vunpack.c.h.b16 %v150
      %v232 = vunpack.c.l.b16 %v151
      %v233 = vunpack.c.h.b16 %v151
      %v234 = vunpack.c.l.b16 %v152
      %v235 = vunpack.c.h.b16 %v152
      %v236 = vunpack.c.l.b16 %v153
      %v237 = vunpack.c.h.b16 %v153
      %v238 = vunpack.c.l.b16 %v154
      %v239 = vunpack.c.h.b16 %v154
      %v240 = vunpack.c.l.b16 %v155
      %v241 = vunpack.c.h.b16 %v155
      %v242 = vunpack.c.l.b16 %v156
      %v243 = vunpack.c.h.b16 %v156
      %v244 = vunpack.c.l.b16 %v157
      %v245 = vunpack.c.h.b16 %v157
      %v246 = vunpack.c.l.b16 %v158
      %v247 = vunpack.c.h.b16 %v158
      %v248 = vunpack.c.l.b16 %v159
      %v249 = vunpack.c.h.b16 %v159
      %v250 = vunpack.c.l.b16 %v160
      %v251 = vunpack.c.h.b16 %v160
      %v252 = vunpack.c.l.b16 %v161
      %v253 = vunpack.c.h.b16 %v161
      %v254 = vunpack.c.l.b16 %v162
      %v255 = vunpack.c.h.b16 %v162
      %v256 = vunpack.c.l.b16 %v163
      %v257 = vunpack.c.h.b16 %v163
      %v258 = vunpack.c.l.b16 %v164
      %v259 = vunpack.c.h.b16 %v164
      %v260 = vunpack.c.l.b16 %v165
      %v261 = vunpack.c.h.b16 %v165
      %v262 = vunpack.c.l.b16 %v166
      %v263 = vunpack.c.h.b16 %v166
      %v264 = vunpack.c.l.b16 %v167
      %v265 = vunpack.c.h.b16 %v167
      %v266 = vunpack.c.l.b16 %v168
      %v267 = vunpack.c.h.b16 %v168
      %v268 = vunpack.c.l.b16 %v169
      %v269 = vunpack.c.h.b16 %v169
      %v270 = vunpack.c.l.b16 %v170
      %v271 = vunpack.c.h.b16 %v170
      %v272 = vunpack.c.l.b16 %v171
      %v273 = vunpack.c.h.b16 %v171
      %v274 = vunpack.c.l.b16 %v172
      %v275 = vunpack.c.h.b16 %v172
      %v276 = vpack.c.b16 %v222, %v220
      %v277 = vpack.c.b16 %v223, %v221
      %v278 = vpack.c.b16 %v226, %v224
      %v279 = vpack.c.b16 %v227, %v225
      %v280 = vpack.c.b16 %v230, %v228
      %v281 = vpack.c.b16 %v231, %v229
      %v282 = vpack.c.b16 %v234, %v232
      %v283 = vpack.c.b16 %v235, %v233
      %v284 = vpack.c.b16 %v238, %v236
      %v285 = vpack.c.b16 %v239, %v237
      %v286 = vpack.c.b16 %v242, %v240
      %v287 = vpack.c.b16 %v243, %v241
      %v288 = vpack.c.b16 %v246, %v244
      %v289 = vpack.c.b16 %v247, %v245
      %v290 = vpack.c.b16 %v250, %v248
      %v291 = vpack.c.b16 %v251, %v249
      %v292 = vpack.c.b16 %v254, %v252
      %v293 = vpack.c.b16 %v255, %v253
      %v294 = vpack.c.b16 %v258, %v256
      %v295 = vpack.c.b16 %v259, %v257
      %v296 = vpack.c.b16 %v262, %v260
      %v297 = vpack.c.b16 %v263, %v261
      %v298 = vpack.c.b16 %v266, %v264
      %v299 = vpack.c.b16 %v267, %v265
      %v300 = vpack.c.b16 %v270, %v268
      %v301 = vpack.c.b16 %v271, %v269
      %v302 = vpack.c.b16 %v274, %v272
      %v303 = vpack.c.b16 %v275, %v273
      %v337 = vunpack.c.l.b16 %v173
      %v338 = vunpack.c.l.b16 %v174
      %v339 = vunpack.c.l.b16 %v175
      %v340 = vunpack.c.l.b16 %v176
      %v341 = vunpack.c.l.b16 %v177
      %v342 = vunpack.c.l.b16 %v178
      %v343 = vunpack.c.l.b16 %v179
      %v344 = vunpack.c.l.b16 %v180
      %v345 = vunpack.c.l.b16 %v181
      %v346 = vunpack.c.l.b16 %v182
      %v347 = vunpack.c.l.b16 %v183
      %v348 = vunpack.c.l.b16 %v184
      %v349 = vunpack.c.l.b16 %v185
      %v350 = vunpack.c.l.b16 %v186
      %v351 = vunpack.c.l.b16 %v187
      %v352 = vunpack.c.l.b16 %v188
      %v353 = vunpack.c.l.b16 %v189
      %v354 = vunpack.c.l.b16 %v190
      %v355 = vunpack.c.l.b16 %v191
      %v356 = vpack.c.b16 %v338, %v337
      %v357 = vpack.c.b16 %v340, %v339
      %v358 = vpack.c.b16 %v342, %v341
      %v359 = vpack.c.b16 %v344, %v343
      %v360 = vpack.c.b16 %v346, %v345
      %v361 = vpack.c.b16 %v348, %v347
      %v362 = vpack.c.b16 %v350, %v349
      %v363 = vpack.c.b16 %v352, %v351
      %v364 = vpack.c.b16 %v354, %v353
      %v365 = vpack.c.b16 %v355, %v355
      %vm375 = vcmask 162816
      %v377 = vsel %vm375, %v277, 0
      %v380 = vsel %vm375, %v279, 0
      %v383 = vsel %vm375, %v281, 0
      %v386 = vsel %vm375, %v283, 0
      %v389 = vsel %vm375, %v285, 0
      %v392 = vsel %vm375, %v287, 0
      %v395 = vsel %vm375, %v289, 0
      %v398 = vsel %vm375, %v291, 0
      %v401 = vsel %vm375, %v293, 0
      %v404 = vsel %vm375, %v295, 0
      %v407 = vsel %vm375, %v297, 0
      %v410 = vsel %vm375, %v299, 0
      %v413 = vsel %vm375, %v301, 0
      %v416 = vsel %vm375, %v303, 0
      %vm418 = vcmask 1041408
      %v420 = vsel %vm418, %v365, 0
      %422 = vmatprep.subr.bf16.mxu0 0
      %423 = vmatpush1.bf16.msra.mxu0 %v356
      %424 = vmatprep.subr.bf16.mxu0 0
      %425 = vmatpush1.bf16.msra.mxu0 %v357
      %426 = vmatprep.subr.bf16.mxu0 0
      %427 = vmatpush1.bf16.msra.mxu0 %v358
      %428 = vmatprep.subr.bf16.mxu0 0
      %429 = vmatpush1.bf16.msra.mxu0 %v359
      %430 = vmatprep.subr.bf16.mxu0 0
      %431 = vmatpush1.bf16.msra.mxu0 %v360
      %432 = vmatprep.subr.bf16.mxu0 0
      %433 = vmatpush1.bf16.msra.mxu0 %v361
      %434 = vmatprep.subr.bf16.mxu0 0
      %435 = vmatpush1.bf16.msra.mxu0 %v362
      %436 = vmatprep.subr.bf16.mxu0 0
      %437 = vmatpush1.bf16.msra.mxu0 %v363
      %438 = vmatprep.subr.bf16.mxu0 0
      %439 = vmatpush1.bf16.msra.mxu0 %v364
      %440 = vmatprep.subr.bf16.mxu0 0
      %441 = vmatpush1.bf16.msra.mxu0 %v420
      %442 = vmatprep.subr.bf16.mxu0 0
      %443 = vmatpush1.bf16.msra.mxu0 0
      %444 = vmatprep.subr.bf16.mxu0 0
      %445 = vmatpush1.bf16.msra.mxu0 0
      %446 = vmatprep.subr.bf16.mxu0 0
      %447 = vmatpush1.bf16.msra.mxu0 0
      %448 = vmatprep.subr.bf16.mxu0 0
      %449 = vmatpush1.bf16.msra.mxu0 0
      %450 = vmatprep.subr.bf16.mxu0 0
      %451 = vmatpush1.bf16.msra.mxu0 0
      %452 = vmatprep.subr.bf16.mxu0 0
      %453 = vmatpush1.bf16.msra.mxu0 0
      %454 = vmatprep.mubr.bf16.mxu0 %v377
      %455 = vmatmul.mubr.bf16.gmra.mrb[0].mxu0 %v276
      %v456 = vpop.f32.mrb[0].mxu0
      %v457 = vadd.f32 0.0, %v456
      %v458 = vpop.f32.mrb[0].mxu0
      %v459 = vpop.f32.mrb[0].mxu0
      %v460 = vadd.f32 0.0, %v459
      %v461 = vpop.f32.mrb[0].mxu0
      %462 = vmatprep.mubr.bf16.mxu0 %v380
      %463 = vmatmul.mubr.bf16.gmra.mrb[0].mxu0 %v278
      %v464 = vpop.f32.mrb[0].mxu0
      %v465 = vadd.f32 0.0, %v464
      %v466 = vpop.f32.mrb[0].mxu0
      %v467 = vpop.f32.mrb[0].mxu0
      %v468 = vadd.f32 0.0, %v467
      %v469 = vpop.f32.mrb[0].mxu0
      %470 = vmatprep.mubr.bf16.mxu0 %v383
      %471 = vmatmul.mubr.bf16.gmra.mrb[0].mxu0 %v280
      %v472 = vpop.f32.mrb[0].mxu0
      %v473 = vadd.f32 0.0, %v472
      %v474 = vpop.f32.mrb[0].mxu0
      %v475 = vpop.f32.mrb[0].mxu0
      %v476 = vadd.f32 0.0, %v475
      %v477 = vpop.f32.mrb[0].mxu0
      %478 = vmatprep.mubr.bf16.mxu0 %v386
      %479 = vmatmul.mubr.bf16.gmra.mrb[0].mxu0 %v282
      %v480 = vpop.f32.mrb[0].mxu0
      %v481 = vadd.f32 0.0, %v480
      %v482 = vpop.f32.mrb[0].mxu0
      %v483 = vpop.f32.mrb[0].mxu0
      %v484 = vadd.f32 0.0, %v483
      %v485 = vpop.f32.mrb[0].mxu0
      %486 = vmatprep.mubr.bf16.mxu0 %v389
      %487 = vmatmul.mubr.bf16.gmra.mrb[0].mxu0 %v284
      %v488 = vpop.f32.mrb[0].mxu0
      %v489 = vadd.f32 0.0, %v488
      %v490 = vpop.f32.mrb[0].mxu0
      %v491 = vpop.f32.mrb[0].mxu0
      %v492 = vadd.f32 0.0, %v491
      %v493 = vpop.f32.mrb[0].mxu0
      %494 = vmatprep.mubr.bf16.mxu0 %v392
      %495 = vmatmul.mubr.bf16.gmra.mrb[0].mxu0 %v286
      %v496 = vpop.f32.mrb[0].mxu0
      %v497 = vadd.f32 0.0, %v496
      %v498 = vpop.f32.mrb[0].mxu0
      %v499 = vpop.f32.mrb[0].mxu0
      %v500 = vadd.f32 0.0, %v499
      %v501 = vpop.f32.mrb[0].mxu0
      %502 = vmatprep.mubr.bf16.mxu0 %v395
      %503 = vmatmul.mubr.bf16.gmra.mrb[0].mxu0 %v288
      %v504 = vpop.f32.mrb[0].mxu0
      %v505 = vadd.f32 0.0, %v504
      %v506 = vpop.f32.mrb[0].mxu0
      %v507 = vpop.f32.mrb[0].mxu0
      %v508 = vadd.f32 0.0, %v507
      %v509 = vpop.f32.mrb[0].mxu0
      %510 = vmatprep.mubr.bf16.mxu0 %v398
      %511 = vmatmul.mubr.bf16.gmra.mrb[0].mxu0 %v290
      %v512 = vpop.f32.mrb[0].mxu0
      %v513 = vadd.f32 0.0, %v512
      %v514 = vpop.f32.mrb[0].mxu0
      %v515 = vpop.f32.mrb[0].mxu0
      %v516 = vadd.f32 0.0, %v515
      %v517 = vpop.f32.mrb[0].mxu0
      %518 = vmatprep.mubr.bf16.mxu0 %v401
      %519 = vmatmul.mubr.bf16.gmra.mrb[0].mxu0 %v292
      %v520 = vpop.f32.mrb[0].mxu0
      %v521 = vadd.f32 0.0, %v520
      %v522 = vpop.f32.mrb[0].mxu0
      %v523 = vpop.f32.mrb[0].mxu0
      %v524 = vadd.f32 0.0, %v523
      %v525 = vpop.f32.mrb[0].mxu0
      %526 = vmatprep.mubr.bf16.mxu0 %v404
      %527 = vmatmul.mubr.bf16.gmra.mrb[0].mxu0 %v294
      %v528 = vpop.f32.mrb[0].mxu0
      %v529 = vadd.f32 0.0, %v528
      %v530 = vpop.f32.mrb[0].mxu0
      %v531 = vpop.f32.mrb[0].mxu0
      %v532 = vadd.f32 0.0, %v531
      %v533 = vpop.f32.mrb[0].mxu0
      %534 = vmatprep.mubr.bf16.mxu0 %v407
      %535 = vmatmul.mubr.bf16.gmra.mrb[0].mxu0 %v296
      %v536 = vpop.f32.mrb[0].mxu0
      %v537 = vadd.f32 0.0, %v536
      %v538 = vpop.f32.mrb[0].mxu0
      %v539 = vpop.f32.mrb[0].mxu0
      %v540 = vadd.f32 0.0, %v539
      %v541 = vpop.f32.mrb[0].mxu0
      %542 = vmatprep.mubr.bf16.mxu0 %v410
      %543 = vmatmul.mubr.bf16.gmra.mrb[0].mxu0 %v298
      %v544 = vpop.f32.mrb[0].mxu0
      %v545 = vadd.f32 0.0, %v544
      %v546 = vpop.f32.mrb[0].mxu0
      %v547 = vpop.f32.mrb[0].mxu0
      %v548 = vadd.f32 0.0, %v547
      %v549 = vpop.f32.mrb[0].mxu0
      %550 = vmatprep.mubr.bf16.mxu0 %v413
      %551 = vmatmul.mubr.bf16.gmra.mrb[0].mxu0 %v300
      %v552 = vpop.f32.mrb[0].mxu0
      %v553 = vadd.f32 0.0, %v552
      %v554 = vpop.f32.mrb[0].mxu0
      %v555 = vpop.f32.mrb[0].mxu0
      %v556 = vadd.f32 0.0, %v555
      %v557 = vpop.f32.mrb[0].mxu0
      %558 = vmatprep.mubr.bf16.mxu0 %v416
      %559 = vmatmul.mubr.bf16.gmra.mrb[0].mxu0 %v302
      %v560 = vpop.f32.mrb[0].mxu0
      %v561 = vadd.f32 0.0, %v560
      %v562 = vpop.f32.mrb[0].mxu0
      %v563 = vpop.f32.mrb[0].mxu0
      %v564 = vadd.f32 0.0, %v563
      %v565 = vpop.f32.mrb[0].mxu0
      %566 = vdwg.mxu0
      %v567 = vmax.f32 %v457, 0.0
      %v568 = vmax.f32 %v460, 0.0
      %v569 = vmax.f32 %v465, 0.0
      %v570 = vmax.f32 %v468, 0.0
      %v571 = vmax.f32 %v473, 0.0
      %v572 = vmax.f32 %v476, 0.0
      %v573 = vmax.f32 %v481, 0.0
      %v574 = vmax.f32 %v484, 0.0
      %v575 = vmax.f32 %v489, 0.0
      %v576 = vmax.f32 %v492, 0.0
      %v577 = vmax.f32 %v497, 0.0
      %v578 = vmax.f32 %v500, 0.0
      %v579 = vmax.f32 %v505, 0.0
      %v580 = vmax.f32 %v508, 0.0
      %v581 = vmax.f32 %v513, 0.0
      %v582 = vmax.f32 %v516, 0.0
      %v583 = vmax.f32 %v521, 0.0
      %v584 = vmax.f32 %v524, 0.0
      %v585 = vmax.f32 %v529, 0.0
      %v586 = vmax.f32 %v532, 0.0
      %v587 = vmax.f32 %v537, 0.0
      %v588 = vmax.f32 %v540, 0.0
      %v589 = vmax.f32 %v545, 0.0
      %v590 = vmax.f32 %v548, 0.0
      %v591 = vmax.f32 %v553, 0.0
      %v592 = vmax.f32 %v556, 0.0
      %v593 = vmax.f32 %v561, 0.0
      %v594 = vmax.f32 %v564, 0.0
      %s595 = scalar_lea.vmem [#allocation2], 8
      %596 = vst [vmem:[%s595] sm:$0xff] %v567
      %597 = vst [vmem:[%s595 + $0x8] sm:$0xff] %v568
      %598 = vst [vmem:[%s595 + $0x10] sm:$0xff] %v569
      %599 = vst [vmem:[%s595 + $0x18] sm:$0xff] %v570
      %600 = vst [vmem:[%s595 + $0x20] sm:$0xff] %v571
      %601 = vst [vmem:[%s595 + $0x28] sm:$0xff] %v572
      %602 = vst [vmem:[%s595 + $0x30] sm:$0xff] %v573
      %s603 = scalar_lea.vmem [#allocation2], 72
      %604 = vst [vmem:[%s603] sm:$0xff] %v574
      %605 = vst [vmem:[%s603 + $0x8] sm:$0xff] %v575
      %606 = vst [vmem:[%s603 + $0x10] sm:$0xff] %v576
      %607 = vst [vmem:[%s603 + $0x18] sm:$0xff] %v577
      %608 = vst [vmem:[%s603 + $0x20] sm:$0xff] %v578
      %609 = vst [vmem:[%s603 + $0x28] sm:$0xff] %v579
      %610 = vst [vmem:[%s603 + $0x30] sm:$0xff] %v580
      %s611 = scalar_lea.vmem [#allocation2], 128
      %612 = vst [vmem:[%s611] sm:$0xff] 0.0
      %s613 = scalar_lea.vmem [#allocation2], 136
      %614 = vst [vmem:[%s613] sm:$0xff] %v581
      %615 = vst [vmem:[%s613 + $0x8] sm:$0xff] %v582
      %616 = vst [vmem:[%s613 + $0x10] sm:$0xff] %v583
      %617 = vst [vmem:[%s613 + $0x18] sm:$0xff] %v584
      %618 = vst [vmem:[%s613 + $0x20] sm:$0xff] %v585
      %619 = vst [vmem:[%s613 + $0x28] sm:$0xff] %v586
      %620 = vst [vmem:[%s613 + $0x30] sm:$0xff] %v587
      %s621 = scalar_lea.vmem [#allocation2], 192
      %622 = vst [vmem:[%s621] sm:$0xff] 0.0
      %s623 = scalar_lea.vmem [#allocation2], 200
      %624 = vst [vmem:[%s623] sm:$0xff] %v588
      %625 = vst [vmem:[%s623 + $0x8] sm:$0xff] %v589
      %626 = vst [vmem:[%s623 + $0x10] sm:$0xff] %v590
      %627 = vst [vmem:[%s623 + $0x18] sm:$0xff] %v591
      %628 = vst [vmem:[%s623 + $0x20] sm:$0xff] %v592
      %629 = vst [vmem:[%s623 + $0x28] sm:$0xff] %v593
      %630 = vst [vmem:[%s623 + $0x30] sm:$0xff] %v594
      %v631 = vld [vmem:[%s603] sm:$0xff]
      %v632 = vld [vmem:[%s603 + $0x8] sm:$0xff]
      %v633 = vld [vmem:[%s603 + $0x10] sm:$0xff]
      %v634 = vld [vmem:[%s603 + $0x18] sm:$0xff]
      %v635 = vld [vmem:[%s603 + $0x20] sm:$0xff]
      %v636 = vld [vmem:[%s603 + $0x28] sm:$0xff]
      %v637 = vld [vmem:[%s603 + $0x30] sm:$0xff]
      %v638 = vld [vmem:[%s623] sm:$0xff]
      %v639 = vld [vmem:[%s623 + $0x8] sm:$0xff]
      %v640 = vld [vmem:[%s623 + $0x10] sm:$0xff]
      %v641 = vld [vmem:[%s623 + $0x18] sm:$0xff]
      %v642 = vld [vmem:[%s623 + $0x20] sm:$0xff]
      %v643 = vld [vmem:[%s623 + $0x28] sm:$0xff]
      %v644 = vld [vmem:[%s623 + $0x30] sm:$0xff]
      %v645 = vld [vmem:[%s621] sm:$0xff]
      %v646 = vld [vmem:[%s621 + $0x8] sm:$0xff]
      %v647 = vld [vmem:[%s621 + $0x10] sm:$0xff]
      %v648 = vld [vmem:[%s621 + $0x18] sm:$0xff]
      %v649 = vld [vmem:[%s621 + $0x20] sm:$0xff]
      %v650 = vld [vmem:[%s621 + $0x28] sm:$0xff]
      %v651 = vld [vmem:[%s621 + $0x30] sm:$0xff]
      %v652 = vld [vmem:[%s595] sm:$0xff]
      %v653 = vld [vmem:[%s595 + $0x8] sm:$0xff]
      %v654 = vld [vmem:[%s595 + $0x10] sm:$0xff]
      %v655 = vld [vmem:[%s595 + $0x18] sm:$0xff]
      %v656 = vld [vmem:[%s595 + $0x20] sm:$0xff]
      %v657 = vld [vmem:[%s595 + $0x28] sm:$0xff]
      %v658 = vld [vmem:[%s595 + $0x30] sm:$0xff]
      %v659 = vmax.f32 %v652, %v631
      %v660 = vmax.f32 %v653, %v632
      %v661 = vmax.f32 %v654, %v633
      %v662 = vmax.f32 %v655, %v634
      %v663 = vmax.f32 %v656, %v635
      %v664 = vmax.f32 %v657, %v636
      %v665 = vmax.f32 %v658, %v637
      %v666 = vld [vmem:[%s613] sm:$0xff]
      %v667 = vld [vmem:[%s613 + $0x8] sm:$0xff]
      %v668 = vld [vmem:[%s613 + $0x10] sm:$0xff]
      %v669 = vld [vmem:[%s613 + $0x18] sm:$0xff]
      %v670 = vld [vmem:[%s613 + $0x20] sm:$0xff]
      %v671 = vld [vmem:[%s613 + $0x28] sm:$0xff]
      %v672 = vld [vmem:[%s613 + $0x30] sm:$0xff]
      %v673 = vmax.f32 %v666, %v638
      %v674 = vmax.f32 %v667, %v639
      %v675 = vmax.f32 %v668, %v640
      %v676 = vmax.f32 %v669, %v641
      %v677 = vmax.f32 %v670, %v642
      %v678 = vmax.f32 %v671, %v643
      %v679 = vmax.f32 %v672, %v644
      %v680 = vmax.f32 %v659, %v673
      %v681 = vmax.f32 %v660, %v674
      %v682 = vmax.f32 %v661, %v675
      %v683 = vmax.f32 %v662, %v676
      %v684 = vmax.f32 %v663, %v677
      %v685 = vmax.f32 %v664, %v678
      %v686 = vmax.f32 %v665, %v679
      %v687 = vld [vmem:[%s611] sm:$0xff]
      %v688 = vld [vmem:[%s611 + $0x8] sm:$0xff]
      %v689 = vld [vmem:[%s611 + $0x10] sm:$0xff]
      %v690 = vld [vmem:[%s611 + $0x18] sm:$0xff]
      %v691 = vld [vmem:[%s611 + $0x20] sm:$0xff]
      %v692 = vld [vmem:[%s611 + $0x28] sm:$0xff]
      %v693 = vld [vmem:[%s611 + $0x30] sm:$0xff]
      %v694 = vmax.f32 %v687, %v645
      %v695 = vmax.f32 %v688, %v646
      %v696 = vmax.f32 %v689, %v647
      %v697 = vmax.f32 %v690, %v648
      %v698 = vmax.f32 %v691, %v649
      %v699 = vmax.f32 %v692, %v650
      %v700 = vmax.f32 %v693, %v651
      %v701 = vmax.f32 %v680, %v694
      %v702 = vmax.f32 %v681, %v695
      %v703 = vmax.f32 %v682, %v696
      %v704 = vmax.f32 %v683, %v697
      %v705 = vmax.f32 %v684, %v698
      %v706 = vmax.f32 %v685, %v699
      %v707 = vmax.f32 %v686, %v700
      %v708 = vmax.f32 %v631, %v638
      %v709 = vmax.f32 %v632, %v639
      %v710 = vmax.f32 %v633, %v640
      %v711 = vmax.f32 %v634, %v641
      %v712 = vmax.f32 %v635, %v642
      %v713 = vmax.f32 %v636, %v643
      %v714 = vmax.f32 %v637, %v644
      %v715 = vmax.f32 %v708, %v645
      %v716 = vmax.f32 %v709, %v646
      %v717 = vmax.f32 %v710, %v647
      %v718 = vmax.f32 %v711, %v648
      %v719 = vmax.f32 %v712, %v649
      %v720 = vmax.f32 %v713, %v650
      %v721 = vmax.f32 %v714, %v651
      %v729 = vrot.slane %v715, 7
      %v730 = vrot.slane %v716, 7
      %v731 = vrot.slane %v717, 7
      %v732 = vrot.slane %v718, 7
      %v733 = vrot.slane %v719, 7
      %v734 = vrot.slane %v720, 7
      %v735 = vrot.slane %v721, 7
      %v743 = vmax.f32 %v701, %v729
      %v744 = vmax.f32 %v702, %v730
      %v745 = vmax.f32 %v703, %v731
      %v746 = vmax.f32 %v704, %v732
      %v747 = vmax.f32 %v705, %v733
      %v748 = vmax.f32 %v706, %v734
      %v749 = vmax.f32 %v707, %v735
      %750 = vst [vmem:[%s143 - $0x1] sm:$0xfe] %v743
      %751 = vst [vmem:[%s143 + $0x7] sm:$0xfe] %v744
      %752 = vst [vmem:[%s143 + $0xf] sm:$0xfe] %v745
      %753 = vst [vmem:[%s143 + $0x17] sm:$0xfe] %v746
      %754 = vst [vmem:[%s143 + $0x1f] sm:$0xfe] %v747
      %755 = vst [vmem:[%s143 + $0x27] sm:$0xfe] %v748
      %756 = vst [vmem:[%s143 + $0x2f] sm:$0xfe] %v749
      %p757 = scmp.lt.s32.totalorder %s13, 1
      %s758 = scalar_select %p757, %s13, 1
      %s759 = smul.addr %s758, 7
      %s760 = smul.addr %s759, 8
      %s761 = scalar_lea.vmem %s2, %s760
      // Predicated region
      $region29: #{zfnet_layer1_forward.1} parent=27 // pred_check
        %p762 = pneg %p78
      $region30: #{zfnet_layer1_forward.1} parent=27 // pred_check_branch
        %764 = sbr.rel (%p762) target = $region32
      $region31: #{zfnet_layer1_forward.1} parent=27 // pred_region
        _
      $region32: #{zfnet_layer1_forward.1} parent=27 // pred_fallthru
        _
    $region28: #{zfnet_layer1_forward.1} parent=5 // pred_fallthru
      _
    %p765 = scmp.le.s32.totalorder 2, %s8
    // Predicated region
    $region33: #{zfnet_layer1_forward.1} parent=5 // pred_check
      %p766 = pneg %p765
    $region34: #{zfnet_layer1_forward.1} parent=5 // pred_check_branch
      %768 = sbr.rel (%p766) target = $region36
    $region35: #{zfnet_layer1_forward.1} parent=5 // pred_region
      %s769 = ssub.s32 %s8, 2
      // Predicated region
      $region37: #{zfnet_layer1_forward.1} parent=35 // pred_check
        %p770 = pneg %p84
      $region38: #{zfnet_layer1_forward.1} parent=35 // pred_check_branch
        %772 = sbr.rel (%p770) target = $region40
      $region39: #{zfnet_layer1_forward.1} parent=35 // pred_region
        %p773 = scmp.lt.s32.totalorder %s14, 1
        %s774 = scalar_select %p773, %s14, 1
        %s775 = smul.addr %s774, 7
        %s776 = smul.addr %s775, 8
        %s777 = scalar_lea.vmem %s2, %s776
      $region40: #{zfnet_layer1_forward.1} parent=35 // pred_fallthru
        _
    $region36: #{zfnet_layer1_forward.1} parent=5 // pred_fallthru
      _
  $region6: #{zfnet_layer1_forward.1} parent=0 // loop_footer
    %s12 = sadd.s32 1, %s8
  $region7: #{zfnet_layer1_forward.1} parent=0 // loop_footer_branch
    %7 = sbr.rel target = $region3
  $region8: #{zfnet_layer1_forward.1} parent=0 // loop_exit
    _

</llo_original>
